<compile_context>
chip_gen: v7x
topology: tpu7x:2x2x1
jax: 0.10.0
libtpu: 0.0.40
codegen_flags: <defaults>
</compile_context>

<pallas_src>
import jax
import jax.numpy as jnp
from jax.experimental import pallas as pl
from jax.experimental.pallas import tpu as pltpu


def _round_up(x, m):
    return ((x + m - 1) // m) * m


def mlp_kernel(x_ref, w1_ref, b1_ref, w2_ref, b2_ref, w3_ref, b3_ref, o_ref):
    # x_ref: (TB, 64) bf16; weights bf16; biases f32; output f32 (TB, C_pad).
    x = x_ref[...]

    # Layer 1: MXU bf16 matmul with f32 accumulation; bias/ReLU on VPU in f32.
    h1 = jnp.dot(x, w1_ref[...], preferred_element_type=jnp.float32) + b1_ref[...]
    h1 = jnp.maximum(h1, 0.0)

    # Dropout(0.3): identity at inference time (no scaling in eval mode).

    # Layer 2.
    h2 = jnp.dot(h1.astype(jnp.bfloat16), w2_ref[...],
                 preferred_element_type=jnp.float32) + b2_ref[...]
    h2 = jnp.maximum(h2, 0.0)

    # Layer 3 (classifier head, zero-padded to 128 lanes for an unmasked store).
    out = jnp.dot(h2.astype(jnp.bfloat16), w3_ref[...],
                  preferred_element_type=jnp.float32) + b3_ref[...]
    o_ref[...] = out.astype(o_ref.dtype)


def landmark_classifier_forward(x, params, *, tb=512):
    """x: (B, 63) float32. params: dict of w1,b1,w2,b2,w3,b3 with weights as (in, out)."""
    w1, b1, w2, b2, w3, b3 = (params[k] for k in ("w1", "b1", "w2", "b2", "w3", "b3"))
    B, d_in = x.shape
    h1d = w1.shape[1]
    h2d = w2.shape[1]
    num_classes = w3.shape[1]

    # ---- padding for TPU-friendly layouts ---------------------------------
    d_pad = _round_up(d_in, 8)                 # 63 -> 64
    c_pad = _round_up(num_classes, 128)        # lane-dense classifier head
    b8 = _round_up(max(B, 1), 8)               # sublane-aligned batch
    tile_b = min(_round_up(tb, 8), b8)         # batch tile (multiple of 8)
    b_pad = _round_up(b8, tile_b)
    n_blocks = b_pad // tile_b

    # ---- prepare operands (cast + pad; done once per call) ----------------
    x_p = jnp.pad(x, ((0, b_pad - B), (0, d_pad - d_in))).astype(jnp.bfloat16)
    w1_p = jnp.pad(w1, ((0, d_pad - d_in), (0, 0))).astype(jnp.bfloat16)
    w2_p = w2.astype(jnp.bfloat16)
    w3_p = jnp.pad(w3, ((0, 0), (0, c_pad - num_classes))).astype(jnp.bfloat16)
    b1_p = b1.reshape(1, h1d).astype(jnp.float32)
    b2_p = b2.reshape(1, h2d).astype(jnp.float32)
    b3_p = jnp.pad(b3.reshape(1, num_classes),
                   ((0, 0), (0, c_pad - num_classes))).astype(jnp.float32)

    # ---- cost hint for the XLA scheduler -----------------------------------
    flops = 2 * b_pad * (d_pad * h1d + h1d * h2d + h2d * c_pad)
    bytes_accessed = (x_p.size * 2 + w1_p.size * 2 + w2_p.size * 2 + w3_p.size * 2
                      + b1_p.size * 4 + b2_p.size * 4 + b3_p.size * 4
                      + b_pad * c_pad * 4)
    cost = pl.CostEstimate(flops=flops, transcendentals=0,
                           bytes_accessed=bytes_accessed)

    out = pl.pallas_call(
        mlp_kernel,
        out_shape=jax.ShapeDtypeStruct((b_pad, c_pad), jnp.float32),
        grid=(n_blocks,),
        in_specs=[
            pl.BlockSpec((tile_b, d_pad), lambda i: (i, 0)),   # x: streamed per tile
            pl.BlockSpec((d_pad, h1d), lambda i: (0, 0)),      # w1: resident
            pl.BlockSpec((1, h1d), lambda i: (0, 0)),          # b1: resident
            pl.BlockSpec((h1d, h2d), lambda i: (0, 0)),        # w2: resident
            pl.BlockSpec((1, h2d), lambda i: (0, 0)),          # b2: resident
            pl.BlockSpec((h2d, c_pad), lambda i: (0, 0)),      # w3 (padded): resident
            pl.BlockSpec((1, c_pad), lambda i: (0, 0)),        # b3 (padded): resident
        ],
        out_specs=pl.BlockSpec((tile_b, c_pad), lambda i: (i, 0)),
        compiler_params=pltpu.CompilerParams(
            dimension_semantics=("parallel",),
        ),
        cost_estimate=cost,
    )(x_p, w1_p, b1_p, w2_p, b2_p, w3_p, b3_p)

    return out[:B, :num_classes]


def init_params(key, num_classes):
    """Deterministic synthetic parameters with the shapes implied by __init__."""
    k1, k2, k3, k4, k5, k6 = jax.random.split(key, 6)
    d_in, h1, h2 = 21 * 3, 128, 64

    def u(k, shape, fan_in):
        bound = 1.0 / jnp.sqrt(fan_in)
        return jax.random.uniform(k, shape, jnp.float32, -bound, bound)

    return {
        "w1": u(k1, (d_in, h1), d_in),        # PyTorch weight (128, 63) transposed
        "b1": u(k2, (1, h1), d_in),
        "w2": u(k3, (h1, h2), h1),            # (64, 128) transposed
        "b2": u(k4, (1, h2), h1),
        "w3": u(k5, (h2, num_classes), h2),   # (num_classes, 64) transposed
        "b3": u(k6, (1, num_classes), h2),
    }


def reference_forward(x, params):
    h1 = jnp.maximum(x @ params["w1"] + params["b1"], 0.0)
    h2 = jnp.maximum(h1 @ params["w2"] + params["b2"], 0.0)
    return h2 @ params["w3"] + params["b3"]


if __name__ == "__main__":
    key = jax.random.PRNGKey(0)
    kx, kp = jax.random.split(key)

    num_classes = 26  # e.g. letters of the alphabet
    batch = 8
    x = jax.random.normal(kx, (batch, 21 * 3), dtype=jnp.float32)
    params = init_params(kp, num_classes)

    out = landmark_classifier_forward(x, params)
    out = jax.block_until_ready(out)

    ref = reference_forward(x, params)
    assert out.shape == (batch, num_classes)
    # Tolerance loosened vs. an all-f32 path because weights/activations feed the MXU
    # in bf16 (f32 accumulation); typical error is a few 1e-3 at these scales.
    assert jnp.allclose(out, ref, atol=2e-2, rtol=2e-2), (
        float(jnp.max(jnp.abs(out - ref))))

    print("KERNEL_OK")
</pallas_src>

<mosaic_0001>
module attributes {stable_mosaic.version = 11 : i64} {
  func.func @mlp_kernel(%arg0: i32, %arg1: memref<8x64xbf16, #tpu.memory_space<vmem>>, %arg2: memref<64x128xbf16, #tpu.memory_space<vmem>>, %arg3: memref<1x128xf32, #tpu.memory_space<vmem>>, %arg4: memref<128x64xbf16, #tpu.memory_space<vmem>>, %arg5: memref<1x64xf32, #tpu.memory_space<vmem>>, %arg6: memref<64x128xbf16, #tpu.memory_space<vmem>>, %arg7: memref<1x128xf32, #tpu.memory_space<vmem>>, %arg8: memref<8x128xf32, #tpu.memory_space<vmem>>) attributes {dimension_semantics = [#tpu.dimension_semantics<parallel>], iteration_bounds = array<i64: 1>, scalar_prefetch = 0 : i64, scratch_operands = 0 : i64, tpu.core_type = #tpu.core_type<tc>, window_params = [{transform_indices = @transform_0, window_bounds = array<i64: 8, 64>}, {pipeline_mode = #tpu.pipeline_mode<synchronous>, transform_indices = @transform_1, window_bounds = array<i64: 64, 128>}, {pipeline_mode = #tpu.pipeline_mode<synchronous>, transform_indices = @transform_2, window_bounds = array<i64: 1, 128>}, {pipeline_mode = #tpu.pipeline_mode<synchronous>, transform_indices = @transform_3, window_bounds = array<i64: 128, 64>}, {pipeline_mode = #tpu.pipeline_mode<synchronous>, transform_indices = @transform_4, window_bounds = array<i64: 1, 64>}, {pipeline_mode = #tpu.pipeline_mode<synchronous>, transform_indices = @transform_5, window_bounds = array<i64: 64, 128>}, {pipeline_mode = #tpu.pipeline_mode<synchronous>, transform_indices = @transform_6, window_bounds = array<i64: 1, 128>}, {transform_indices = @transform_7, window_bounds = array<i64: 8, 128>}]} {
    %c0 = arith.constant 0 : index
    %c0_0 = arith.constant 0 : index
    %0 = vector.load %arg1[%c0, %c0_0] : memref<8x64xbf16, #tpu.memory_space<vmem>>, vector<8x64xbf16>
    %c0_1 = arith.constant 0 : index
    %c0_2 = arith.constant 0 : index
    %1 = vector.load %arg2[%c0_1, %c0_2] : memref<64x128xbf16, #tpu.memory_space<vmem>>, vector<64x128xbf16>
    %cst = arith.constant dense<0.000000e+00> : vector<8x128xf32>
    %2 = tpu.matmul %0, %1, %cst {dimension_numbers = #tpu.dot_dimension_numbers<[1], [0], [0], [1], [0, 0, 1, 1], [], []>} : vector<8x64xbf16>, vector<64x128xbf16>, vector<8x128xf32> -> vector<8x128xf32>
    %c0_3 = arith.constant 0 : index
    %c0_4 = arith.constant 0 : index
    %3 = vector.load %arg3[%c0_3, %c0_4] : memref<1x128xf32, #tpu.memory_space<vmem>>, vector<1x128xf32>
    %4 = vector.broadcast %3 : vector<1x128xf32> to vector<8x128xf32>
    %5 = arith.addf %2, %4 : vector<8x128xf32>
    %cst_5 = arith.constant 0.000000e+00 : f32
    %6 = vector.broadcast %cst_5 : f32 to vector<8x128xf32>
    %7 = arith.maximumf %5, %6 : vector<8x128xf32>
    %8 = arith.truncf %7 : vector<8x128xf32> to vector<8x128xbf16>
    %c0_6 = arith.constant 0 : index
    %c0_7 = arith.constant 0 : index
    %9 = vector.load %arg4[%c0_6, %c0_7] : memref<128x64xbf16, #tpu.memory_space<vmem>>, vector<128x64xbf16>
    %cst_8 = arith.constant dense<0.000000e+00> : vector<8x64xf32>
    %10 = tpu.matmul %8, %9, %cst_8 {dimension_numbers = #tpu.dot_dimension_numbers<[1], [0], [0], [1], [0, 0, 1, 1], [], []>} : vector<8x128xbf16>, vector<128x64xbf16>, vector<8x64xf32> -> vector<8x64xf32>
    %c0_9 = arith.constant 0 : index
    %c0_10 = arith.constant 0 : index
    %11 = vector.load %arg5[%c0_9, %c0_10] : memref<1x64xf32, #tpu.memory_space<vmem>>, vector<1x64xf32>
    %12 = vector.broadcast %11 : vector<1x64xf32> to vector<8x64xf32>
    %13 = arith.addf %10, %12 : vector<8x64xf32>
    %cst_11 = arith.constant 0.000000e+00 : f32
    %14 = vector.broadcast %cst_11 : f32 to vector<8x64xf32>
    %15 = arith.maximumf %13, %14 : vector<8x64xf32>
    %16 = arith.truncf %15 : vector<8x64xf32> to vector<8x64xbf16>
    %c0_12 = arith.constant 0 : index
    %c0_13 = arith.constant 0 : index
    %17 = vector.load %arg6[%c0_12, %c0_13] : memref<64x128xbf16, #tpu.memory_space<vmem>>, vector<64x128xbf16>
    %cst_14 = arith.constant dense<0.000000e+00> : vector<8x128xf32>
    %18 = tpu.matmul %16, %17, %cst_14 {dimension_numbers = #tpu.dot_dimension_numbers<[1], [0], [0], [1], [0, 0, 1, 1], [], []>} : vector<8x64xbf16>, vector<64x128xbf16>, vector<8x128xf32> -> vector<8x128xf32>
    %c0_15 = arith.constant 0 : index
    %c0_16 = arith.constant 0 : index
    %19 = vector.load %arg7[%c0_15, %c0_16] : memref<1x128xf32, #tpu.memory_space<vmem>>, vector<1x128xf32>
    %20 = vector.broadcast %19 : vector<1x128xf32> to vector<8x128xf32>
    %21 = arith.addf %18, %20 : vector<8x128xf32>
    %c0_17 = arith.constant 0 : index
    %c0_18 = arith.constant 0 : index
    %22 = vector.load %arg8[%c0_17, %c0_18] : memref<8x128xf32, #tpu.memory_space<vmem>>, vector<8x128xf32>
    tpu.vector_store %arg8[%c0_17, %c0_18], %21 {strides = array<i32>} : memref<8x128xf32, #tpu.memory_space<vmem>>, vector<8x128xf32>,
    return
  }
  func.func @transform_0(%arg0: i32) -> (i32, i32) {
    %c0_i32 = arith.constant 0 : i32
    %c0_i32_0 = arith.constant 0 : i32
    return %arg0, %c0_i32 : i32, i32
  }
  func.func @transform_1(%arg0: i32) -> (i32, i32) {
    %c0_i32 = arith.constant 0 : i32
    %c0_i32_0 = arith.constant 0 : i32
    %c0_i32_1 = arith.constant 0 : i32
    return %c0_i32, %c0_i32_0 : i32, i32
  }
  func.func @transform_2(%arg0: i32) -> (i32, i32) {
    %c0_i32 = arith.constant 0 : i32
    %c0_i32_0 = arith.constant 0 : i32
    %c0_i32_1 = arith.constant 0 : i32
    return %c0_i32, %c0_i32_0 : i32, i32
  }
  func.func @transform_3(%arg0: i32) -> (i32, i32) {
    %c0_i32 = arith.constant 0 : i32
    %c0_i32_0 = arith.constant 0 : i32
    %c0_i32_1 = arith.constant 0 : i32
    return %c0_i32, %c0_i32_0 : i32, i32
  }
  func.func @transform_4(%arg0: i32) -> (i32, i32) {
    %c0_i32 = arith.constant 0 : i32
    %c0_i32_0 = arith.constant 0 : i32
    %c0_i32_1 = arith.constant 0 : i32
    return %c0_i32, %c0_i32_0 : i32, i32
  }
  func.func @transform_5(%arg0: i32) -> (i32, i32) {
    %c0_i32 = arith.constant 0 : i32
    %c0_i32_0 = arith.constant 0 : i32
    %c0_i32_1 = arith.constant 0 : i32
    return %c0_i32, %c0_i32_0 : i32, i32
  }
  func.func @transform_6(%arg0: i32) -> (i32, i32) {
    %c0_i32 = arith.constant 0 : i32
    %c0_i32_0 = arith.constant 0 : i32
    %c0_i32_1 = arith.constant 0 : i32
    return %c0_i32, %c0_i32_0 : i32, i32
  }
  func.func @transform_7(%arg0: i32) -> (i32, i32) {
    %c0_i32 = arith.constant 0 : i32
    %c0_i32_0 = arith.constant 0 : i32
    return %arg0, %c0_i32 : i32, i32
  }
}

</mosaic_0001>

<llo_original>
// kernel: tpu_custom_call.1
$region0: #{tpu_custom_call.1}
  #allocation0 [shape = 'u32[]', space=smem, size = 0x4, offset = 0x4, fixed_abs, tag = 'smem constant byte address 0x4 - core index']
  #allocation1 [shape = 'u32[144,128]{1,0:T(1,128)}', space=vmem, size = 0x12000, scoped, tag = 'internal scratch']
  %s0 = inlined_call_operand.vmem [shape: bf16[8,64], index: 0, kind: input, shape index: {}]
  %s1 = inlined_call_operand.vmem [shape: bf16[64,128], index: 1, kind: input, shape index: {}]
  %s2 = inlined_call_operand.vmem [shape: f32[1,128], index: 2, kind: input, shape index: {}]
  %s3 = inlined_call_operand.vmem [shape: bf16[128,64], index: 3, kind: input, shape index: {}]
  %s4 = inlined_call_operand.vmem [shape: f32[1,64], index: 4, kind: input, shape index: {}]
  %s5 = inlined_call_operand.vmem [shape: bf16[64,128], index: 5, kind: input, shape index: {}]
  %s6 = inlined_call_operand.vmem [shape: f32[1,128], index: 6, kind: input, shape index: {}]
  %s7 = inlined_call_operand.hbm [shape: f32[8,128], index: 7, kind: output, shape index: {}]
  %s8 = sld [smem:[#allocation0]]
  $region38: #{tpu_custom_call.1} parent=0
    _
  %s10 = ssub.s32 1, %s8
  %s11 = scalar_select 0, %s10, %s8
  $region1: #{tpu_custom_call.1} parent=0
    #allocation2 [shape = 'u8[4096]{0}', space=vmem, size = 0x1000, scoped, tag = 'output window, operand 0, single buffered']
    #allocation3 [shape = 's32[1]{0}', space=sflag, size = 0x4, scoped, tag = 'scoped memory for tpu_custom_call.1']
    %12 = vsyncpa [#allocation3], 0
    // Predicated region
    $region2: #{tpu_custom_call.1} parent=1 // pred_check
      _
    $region3: #{tpu_custom_call.1} parent=1 // pred_check_branch
      %14 = sbr.rel (0) target = $region5
    $region4: #{tpu_custom_call.1} parent=1 // pred_region
      _
    $region5: #{tpu_custom_call.1} parent=1 // pred_fallthru
      _
    // Predicated region
    $region6: #{tpu_custom_call.1} parent=1 // pred_check
      _
    $region7: #{tpu_custom_call.1} parent=1 // pred_check_branch
      %16 = sbr.rel (0) target = $region9
    $region8: #{tpu_custom_call.1} parent=1 // pred_region
      _
    $region9: #{tpu_custom_call.1} parent=1 // pred_fallthru
      _
    // Predicated region
    $region10: #{tpu_custom_call.1} parent=1 // pred_check
      _
    $region11: #{tpu_custom_call.1} parent=1 // pred_check_branch
      %18 = sbr.rel (0) target = $region13
    $region12: #{tpu_custom_call.1} parent=1 // pred_region
      _
    $region13: #{tpu_custom_call.1} parent=1 // pred_fallthru
      _
    // Predicated region
    $region14: #{tpu_custom_call.1} parent=1 // pred_check
      _
    $region15: #{tpu_custom_call.1} parent=1 // pred_check_branch
      %20 = sbr.rel (0) target = $region17
    $region16: #{tpu_custom_call.1} parent=1 // pred_region
      _
    $region17: #{tpu_custom_call.1} parent=1 // pred_fallthru
      _
    // Predicated region
    $region18: #{tpu_custom_call.1} parent=1 // pred_check
      _
    $region19: #{tpu_custom_call.1} parent=1 // pred_check_branch
      %22 = sbr.rel (0) target = $region21
    $region20: #{tpu_custom_call.1} parent=1 // pred_region
      _
    $region21: #{tpu_custom_call.1} parent=1 // pred_fallthru
      _
    // Predicated region
    $region22: #{tpu_custom_call.1} parent=1 // pred_check
      _
    $region23: #{tpu_custom_call.1} parent=1 // pred_check_branch
      %24 = sbr.rel (0) target = $region25
    $region24: #{tpu_custom_call.1} parent=1 // pred_region
      _
    $region25: #{tpu_custom_call.1} parent=1 // pred_fallthru
      _
    // Predicated region
    $region26: #{tpu_custom_call.1} parent=1 // pred_check
      _
    $region27: #{tpu_custom_call.1} parent=1 // pred_check_branch
      %26 = sbr.rel (0) target = $region29
    $region28: #{tpu_custom_call.1} parent=1 // pred_region
      _
    $region29: #{tpu_custom_call.1} parent=1 // pred_fallthru
      _
    %v28 = vld [vmem:[%s0] sm:$0xf]
    %v29 = vld [vmem:[%s1] sm:$0xf]
    %v30 = vld [vmem:[%s1 + $0x4] sm:$0xf]
    %v31 = vld [vmem:[%s1 + $0x8] sm:$0xf]
    %v32 = vld [vmem:[%s1 + $0xc] sm:$0xf]
    %v33 = vld [vmem:[%s1 + $0x10] sm:$0xf]
    %v34 = vld [vmem:[%s1 + $0x14] sm:$0xf]
    %v35 = vld [vmem:[%s1 + $0x18] sm:$0xf]
    %v36 = vld [vmem:[%s1 + $0x1c] sm:$0xf]
    %v37 = vld [vmem:[%s2] sm:$0x1]
    %v39 = vlaneseq
    %v40 = vshrl.u32 %v39, 7
    %v41 = vsub.s32 0, %v40
    %v42 = vrot.slane %v37, %v41
    %v52 = vunpack.c.l.b16 %v29
    %v53 = vunpack.c.l.b16 %v30
    %v54 = vunpack.c.l.b16 %v31
    %v55 = vunpack.c.l.b16 %v32
    %v56 = vunpack.c.l.b16 %v33
    %v57 = vunpack.c.l.b16 %v34
    %v58 = vunpack.c.l.b16 %v35
    %v59 = vunpack.c.l.b16 %v36
    %v60 = vpack.c.b16 %v53, %v52
    %v61 = vpack.c.b16 %v55, %v54
    %v62 = vpack.c.b16 %v57, %v56
    %v63 = vpack.c.b16 %v59, %v58
    %vm68 = vcmask 523264
    %v70 = vsel %vm68, %v28, 0
    %72 = vmatprep.subr.bf16.mxu0 0
    %73 = vmatpush1.bf16.msra.mxu0 %v60
    %74 = vmatprep.subr.bf16.mxu0 0
    %75 = vmatpush1.bf16.msra.mxu0 %v61
    %76 = vmatprep.subr.bf16.mxu0 0
    %77 = vmatpush1.bf16.msra.mxu0 %v62
    %78 = vmatprep.subr.bf16.mxu0 0
    %79 = vmatpush1.bf16.msra.mxu0 %v63
    %80 = vmatprep.subr.bf16.mxu0 0
    %81 = vmatpush1.bf16.msra.mxu0 0
    %82 = vmatprep.subr.bf16.mxu0 0
    %83 = vmatpush1.bf16.msra.mxu0 0
    %84 = vmatprep.subr.bf16.mxu0 0
    %85 = vmatpush1.bf16.msra.mxu0 0
    %86 = vmatprep.subr.bf16.mxu0 0
    %87 = vmatpush1.bf16.msra.mxu0 0
    %88 = vmatprep.subr.bf16.mxu0 0
    %89 = vmatpush1.bf16.msra.mxu0 0
    %90 = vmatprep.subr.bf16.mxu0 0
    %91 = vmatpush1.bf16.msra.mxu0 0
    %92 = vmatprep.subr.bf16.mxu0 0
    %93 = vmatpush1.bf16.msra.mxu0 0
    %94 = vmatprep.subr.bf16.mxu0 0
    %95 = vmatpush1.bf16.msra.mxu0 0
    %96 = vmatprep.subr.bf16.mxu0 0
    %97 = vmatpush1.bf16.msra.mxu0 0
    %98 = vmatprep.subr.bf16.mxu0 0
    %99 = vmatpush1.bf16.msra.mxu0 0
    %100 = vmatprep.subr.bf16.mxu0 0
    %101 = vmatpush1.bf16.msra.mxu0 0
    %102 = vmatprep.subr.bf16.mxu0 0
    %103 = vmatpush1.bf16.msra.mxu0 0
    %104 = vmatprep.mubr.bf16.mxu0 0
    %105 = vmatmul.mubr.bf16.gmra.mrb[0].mxu0 %v70
    %v106 = vpop.f32.mrb[0].mxu0
    %v107 = vadd.f32 %v42, %v106
    %v108 = vpop.f32.mrb[0].mxu0
    %v109 = vpop.f32.mrb[0].mxu0
    %v110 = vpop.f32.mrb[0].mxu0
    %111 = vdwg.mxu0
    %v112 = vmax.f32 %v107, 0.0
    %v113 = vpack.c.bf16 %v112, %v112
    %v114 = vld [vmem:[%s3] sm:$0xf]
    %v115 = vld [vmem:[%s3 + $0x4] sm:$0xf]
    %v116 = vld [vmem:[%s3 + $0x8] sm:$0xf]
    %v117 = vld [vmem:[%s3 + $0xc] sm:$0xf]
    %v118 = vld [vmem:[%s3 + $0x10] sm:$0xf]
    %v119 = vld [vmem:[%s3 + $0x14] sm:$0xf]
    %v120 = vld [vmem:[%s3 + $0x18] sm:$0xf]
    %v121 = vld [vmem:[%s3 + $0x1c] sm:$0xf]
    %v122 = vld [vmem:[%s3 + $0x20] sm:$0xf]
    %v123 = vld [vmem:[%s3 + $0x24] sm:$0xf]
    %v124 = vld [vmem:[%s3 + $0x28] sm:$0xf]
    %v125 = vld [vmem:[%s3 + $0x2c] sm:$0xf]
    %v126 = vld [vmem:[%s3 + $0x30] sm:$0xf]
    %v127 = vld [vmem:[%s3 + $0x34] sm:$0xf]
    %v128 = vld [vmem:[%s3 + $0x38] sm:$0xf]
    %v129 = vld [vmem:[%s3 + $0x3c] sm:$0xf]
    %v130 = vld [vmem:[%s4] sm:$0x1]
    %v132 = vlaneseq
    %v133 = vshrl.u32 %v132, 7
    %v134 = vsub.s32 0, %v133
    %v135 = vrot.slane %v130, %v134
    %v153 = vunpack.c.l.b16 %v114
    %v154 = vunpack.c.l.b16 %v115
    %v155 = vunpack.c.l.b16 %v116
    %v156 = vunpack.c.l.b16 %v117
    %v157 = vunpack.c.l.b16 %v118
    %v158 = vunpack.c.l.b16 %v119
    %v159 = vunpack.c.l.b16 %v120
    %v160 = vunpack.c.l.b16 %v121
    %v161 = vunpack.c.l.b16 %v122
    %v162 = vunpack.c.l.b16 %v123
    %v163 = vunpack.c.l.b16 %v124
    %v164 = vunpack.c.l.b16 %v125
    %v165 = vunpack.c.l.b16 %v126
    %v166 = vunpack.c.l.b16 %v127
    %v167 = vunpack.c.l.b16 %v128
    %v168 = vunpack.c.l.b16 %v129
    %v169 = vpack.c.b16 %v154, %v153
    %v170 = vpack.c.b16 %v156, %v155
    %v171 = vpack.c.b16 %v158, %v157
    %v172 = vpack.c.b16 %v160, %v159
    %v173 = vpack.c.b16 %v162, %v161
    %v174 = vpack.c.b16 %v164, %v163
    %v175 = vpack.c.b16 %v166, %v165
    %v176 = vpack.c.b16 %v168, %v167
    %185 = vmatprep.subr.bf16.mxu0 0
    %186 = vmatpush1.bf16.msra.mxu0 %v169
    %187 = vmatprep.subr.bf16.mxu0 0
    %188 = vmatpush1.bf16.msra.mxu0 %v170
    %189 = vmatprep.subr.bf16.mxu0 0
    %190 = vmatpush1.bf16.msra.mxu0 %v171
    %191 = vmatprep.subr.bf16.mxu0 0
    %192 = vmatpush1.bf16.msra.mxu0 %v172
    %193 = vmatprep.subr.bf16.mxu0 0
    %194 = vmatpush1.bf16.msra.mxu0 %v173
    %195 = vmatprep.subr.bf16.mxu0 0
    %196 = vmatpush1.bf16.msra.mxu0 %v174
    %197 = vmatprep.subr.bf16.mxu0 0
    %198 = vmatpush1.bf16.msra.mxu0 %v175
    %199 = vmatprep.subr.bf16.mxu0 0
    %200 = vmatpush1.bf16.msra.mxu0 %v176
    %201 = vmatprep.subr.bf16.mxu0 0
    %202 = vmatpush1.bf16.msra.mxu0 0
    %203 = vmatprep.subr.bf16.mxu0 0
    %204 = vmatpush1.bf16.msra.mxu0 0
    %205 = vmatprep.subr.bf16.mxu0 0
    %206 = vmatpush1.bf16.msra.mxu0 0
    %207 = vmatprep.subr.bf16.mxu0 0
    %208 = vmatpush1.bf16.msra.mxu0 0
    %209 = vmatprep.subr.bf16.mxu0 0
    %210 = vmatpush1.bf16.msra.mxu0 0
    %211 = vmatprep.subr.bf16.mxu0 0
    %212 = vmatpush1.bf16.msra.mxu0 0
    %213 = vmatprep.subr.bf16.mxu0 0
    %214 = vmatpush1.bf16.msra.mxu0 0
    %215 = vmatprep.subr.bf16.mxu0 0
    %216 = vmatpush1.bf16.msra.mxu0 0
    %217 = vmatprep.mubr.bf16.mxu0 0
    %218 = vmatmul.mubr.bf16.gmra.mrb[0].mxu0 %v113
    %v219 = vpop.f32.mrb[0].mxu0
    %v220 = vadd.f32 %v135, %v219
    %v221 = vpop.f32.mrb[0].mxu0
    %v222 = vpop.f32.mrb[0].mxu0
    %v223 = vpop.f32.mrb[0].mxu0
    %224 = vdwg.mxu0
    %v225 = vmax.f32 %v220, 0.0
    %v226 = vpack.c.bf16 %v225, %v225
    %v227 = vld [vmem:[%s5] sm:$0xf]
    %v228 = vld [vmem:[%s5 + $0x4] sm:$0xf]
    %v229 = vld [vmem:[%s5 + $0x8] sm:$0xf]
    %v230 = vld [vmem:[%s5 + $0xc] sm:$0xf]
    %v231 = vld [vmem:[%s5 + $0x10] sm:$0xf]
    %v232 = vld [vmem:[%s5 + $0x14] sm:$0xf]
    %v233 = vld [vmem:[%s5 + $0x18] sm:$0xf]
    %v234 = vld [vmem:[%s5 + $0x1c] sm:$0xf]
    %v235 = vld [vmem:[%s6] sm:$0x1]
    %v237 = vlaneseq
    %v238 = vshrl.u32 %v237, 7
    %v239 = vsub.s32 0, %v238
    %v240 = vrot.slane %v235, %v239
    %v250 = vunpack.c.l.b16 %v227
    %v251 = vunpack.c.l.b16 %v228
    %v252 = vunpack.c.l.b16 %v229
    %v253 = vunpack.c.l.b16 %v230
    %v254 = vunpack.c.l.b16 %v231
    %v255 = vunpack.c.l.b16 %v232
    %v256 = vunpack.c.l.b16 %v233
    %v257 = vunpack.c.l.b16 %v234
    %v258 = vpack.c.b16 %v251, %v250
    %v259 = vpack.c.b16 %v253, %v252
    %v260 = vpack.c.b16 %v255, %v254
    %v261 = vpack.c.b16 %v257, %v256
    %v267 = vsel %vm68, %v226, 0
    %269 = vmatprep.subr.bf16.mxu0 0
    %270 = vmatpush1.bf16.msra.mxu0 %v258
    %271 = vmatprep.subr.bf16.mxu0 0
    %272 = vmatpush1.bf16.msra.mxu0 %v259
    %273 = vmatprep.subr.bf16.mxu0 0
    %274 = vmatpush1.bf16.msra.mxu0 %v260
    %275 = vmatprep.subr.bf16.mxu0 0
    %276 = vmatpush1.bf16.msra.mxu0 %v261
    %277 = vmatprep.subr.bf16.mxu0 0
    %278 = vmatpush1.bf16.msra.mxu0 0
    %279 = vmatprep.subr.bf16.mxu0 0
    %280 = vmatpush1.bf16.msra.mxu0 0
    %281 = vmatprep.subr.bf16.mxu0 0
    %282 = vmatpush1.bf16.msra.mxu0 0
    %283 = vmatprep.subr.bf16.mxu0 0
    %284 = vmatpush1.bf16.msra.mxu0 0
    %285 = vmatprep.subr.bf16.mxu0 0
    %286 = vmatpush1.bf16.msra.mxu0 0
    %287 = vmatprep.subr.bf16.mxu0 0
    %288 = vmatpush1.bf16.msra.mxu0 0
    %289 = vmatprep.subr.bf16.mxu0 0
    %290 = vmatpush1.bf16.msra.mxu0 0
    %291 = vmatprep.subr.bf16.mxu0 0
    %292 = vmatpush1.bf16.msra.mxu0 0
    %293 = vmatprep.subr.bf16.mxu0 0
    %294 = vmatpush1.bf16.msra.mxu0 0
    %295 = vmatprep.subr.bf16.mxu0 0
    %296 = vmatpush1.bf16.msra.mxu0 0
    %297 = vmatprep.subr.bf16.mxu0 0
    %298 = vmatpush1.bf16.msra.mxu0 0
    %299 = vmatprep.subr.bf16.mxu0 0
    %300 = vmatpush1.bf16.msra.mxu0 0
    %301 = vmatprep.mubr.bf16.mxu0 0
    %302 = vmatmul.mubr.bf16.gmra.mrb[0].mxu0 %v267
    %v303 = vpop.f32.mrb[0].mxu0
    %v304 = vadd.f32 %v240, %v303
    %v305 = vpop.f32.mrb[0].mxu0
    %v306 = vpop.f32.mrb[0].mxu0
    %v307 = vpop.f32.mrb[0].mxu0
    %308 = vdwg.mxu0
    %309 = vst [vmem:[#allocation2] sm:$0xff] %v304
    // Predicated region
    $region30: #{tpu_custom_call.1} parent=1 // pred_check
      _
    $region31: #{tpu_custom_call.1} parent=1 // pred_check_branch
      %311 = sbr.rel (0) target = $region33
    $region32: #{tpu_custom_call.1} parent=1 // pred_region
      %s313 = ssub.s32 128, 128
      %314 = vsyncadd [#allocation3], %s313
      %s316 = sshll.u32 [#allocation2], 4
      %s317 = int_to_ptr.vmem [resolvable:$true] %s316
      %319 = dma.vmem_to_hbm [thread:$0]  %s317, 128, %s7, [#allocation3]
    $region33: #{tpu_custom_call.1} parent=1 // pred_fallthru
      _
    // Predicated region
    $region34: #{tpu_custom_call.1} parent=1 // pred_check
      _
    $region35: #{tpu_custom_call.1} parent=1 // pred_check_branch
      %321 = sbr.rel (0) target = $region37
    $region36: #{tpu_custom_call.1} parent=1 // pred_region
      %322 = dma.done [#allocation3], 128
    $region37: #{tpu_custom_call.1} parent=1 // pred_fallthru
      _
    %323 = vsyncpa [#allocation3], 1

</llo_original>
